<compile_context>
chip_gen: v7x
topology: tpu7x:2x2x1
jax: 0.10.0
libtpu: 0.0.40
codegen_flags: <defaults>
</compile_context>

<pallas_src>
import jax
import jax.numpy as jnp
from jax.experimental import pallas as pl
from jax.experimental.pallas import tpu as pltpu

# ---- model sizes (synthetic, small) ----
MANIFOLD_SIZE = 32
DIRECTION_THETAS_SIZE = 16
DISTANCE_THETAS_SIZE = 16
IN_DIM = MANIFOLD_SIZE + DIRECTION_THETAS_SIZE + DISTANCE_THETAS_SIZE  # 64
HIDDEN_SIZE = 128
OUT_PAD = 128            # output padded to a full 128-lane slab
NUM_BLOCKS = 1           # matches module default
BATCH = 8
LEAKY_SLOPE = 0.01
BN_EPS = 1e-5


def _round_up(n, m):
    return ((n + m - 1) // m) * m


def _leaky_relu(v):
    return jnp.where(v > 0, v, LEAKY_SLOPE * v)


def sdirdiststate_kernel(xin_ref, win_ref, w1_ref, w2_ref, wo_ref, bias_ref,
                         out_ref):
    b_in = bias_ref[0:1, :]
    b1 = bias_ref[1:2, :]
    b2 = bias_ref[2:3, :]
    bo = bias_ref[3:4, :]

    # input_layer: x,y,z pre-concatenated; weight slabs pre-concatenated.
    h = jnp.dot(xin_ref[...].astype(jnp.bfloat16), win_ref[...],
                preferred_element_type=jnp.float32) + b_in

    # residual block (eval mode; BN folded into w1/b1, w2/b2 in the wrapper).
    r = jnp.dot(h.astype(jnp.bfloat16), w1_ref[...],
                preferred_element_type=jnp.float32) + b1
    r = _leaky_relu(r)
    r = jnp.dot(r.astype(jnp.bfloat16), w2_ref[...],
                preferred_element_type=jnp.float32) + b2
    h = _leaky_relu(r + h)

    # output_layer (columns padded to 128 lanes -> unmasked stores).
    out_ref[...] = jnp.dot(h.astype(jnp.bfloat16), wo_ref[...],
                           preferred_element_type=jnp.float32) + bo


def fold_params(params):
    """Concat input weights, fold BN into Linears (f32), pack biases, cast bf16."""
    w_in = jnp.concatenate([params["wx"], params["wy"], params["wz"]], axis=0)

    def bn_fold(gamma, beta, mean, var):
        scale = gamma / jnp.sqrt(var + BN_EPS)
        shift = beta - mean * scale
        return scale, shift

    s1, t1 = bn_fold(params["g1"], params["be1"], params["m1"], params["v1"])
    s2, t2 = bn_fold(params["g2"], params["be2"], params["m2"], params["v2"])

    w1f = params["w1"] * s1[None, :]
    b1f = params["b1"] * s1 + t1
    w2f = params["w2"] * s2[None, :]
    b2f = params["b2"] * s2 + t2

    m = params["wo"].shape[1]
    wo_p = jnp.zeros((HIDDEN_SIZE, OUT_PAD), jnp.float32).at[:, :m].set(params["wo"])
    bo_p = jnp.zeros((OUT_PAD,), jnp.float32).at[:m].set(params["bo"])

    biases = jnp.stack([params["bin"], b1f, b2f, bo_p], axis=0)  # [4, 128] f32

    return {
        "w_in": w_in.astype(jnp.bfloat16),
        "w1": w1f.astype(jnp.bfloat16),
        "w2": w2f.astype(jnp.bfloat16),
        "wo": wo_p.astype(jnp.bfloat16),
        "biases": biases.astype(jnp.float32),
    }


def sdirdiststate_forward(x, y, z, params, *, block_batch=128):
    """Fused forward pass. x:[B,M], y:[B,Dir], z:[B,Dist] -> [B,M]."""
    B = x.shape[0]
    M = params["wo"].shape[1]
    folded = fold_params(params)

    xin = jnp.concatenate([x, y, z], axis=1).astype(jnp.float32)  # [B, 64]

    bm = min(block_batch, _round_up(B, 8))
    b_pad = _round_up(B, bm)
    if b_pad != B:
        xin = jnp.pad(xin, ((0, b_pad - B), (0, 0)))
    grid = (b_pad // bm,)

    flops = 2 * b_pad * (IN_DIM * HIDDEN_SIZE
                         + 2 * HIDDEN_SIZE * HIDDEN_SIZE
                         + HIDDEN_SIZE * OUT_PAD)
    bytes_accessed = (xin.size * 4
                      + folded["w_in"].size * 2 + folded["w1"].size * 2
                      + folded["w2"].size * 2 + folded["wo"].size * 2
                      + folded["biases"].size * 4
                      + b_pad * OUT_PAD * 4)

    out = pl.pallas_call(
        sdirdiststate_kernel,
        out_shape=jax.ShapeDtypeStruct((b_pad, OUT_PAD), jnp.float32),
        grid=grid,
        in_specs=[
            pl.BlockSpec((bm, IN_DIM), lambda i: (i, 0)),
            pl.BlockSpec((IN_DIM, HIDDEN_SIZE), lambda i: (0, 0)),
            pl.BlockSpec((HIDDEN_SIZE, HIDDEN_SIZE), lambda i: (0, 0)),
            pl.BlockSpec((HIDDEN_SIZE, HIDDEN_SIZE), lambda i: (0, 0)),
            pl.BlockSpec((HIDDEN_SIZE, OUT_PAD), lambda i: (0, 0)),
            pl.BlockSpec((4, HIDDEN_SIZE), lambda i: (0, 0)),
        ],
        out_specs=pl.BlockSpec((bm, OUT_PAD), lambda i: (i, 0)),
        compiler_params=pltpu.CompilerParams(
            dimension_semantics=("parallel",)),
        cost_estimate=pl.CostEstimate(flops=flops, transcendentals=0,
                                      bytes_accessed=bytes_accessed),
    )(xin, folded["w_in"], folded["w1"], folded["w2"], folded["wo"],
      folded["biases"])

    return out[:B, :M]


def init_params(key, manifold=MANIFOLD_SIZE, dirsz=DIRECTION_THETAS_SIZE,
                distsz=DISTANCE_THETAS_SIZE, hidden=HIDDEN_SIZE):
    """Deterministic synthetic parameters (PyTorch-like uniform init)."""
    keys = jax.random.split(key, 8)
    in_dim = manifold + dirsz + distsz

    def lin(kw, kb, fan_in, fan_out):
        bound = 1.0 / jnp.sqrt(jnp.float32(fan_in))
        w = jax.random.uniform(kw, (fan_in, fan_out), jnp.float32, -bound, bound)
        b = jax.random.uniform(kb, (fan_out,), jnp.float32, -bound, bound)
        return w, b

    w_in, b_in = lin(keys[0], keys[1], in_dim, hidden)      # input_layer
    w1, b1 = lin(keys[2], keys[3], hidden, hidden)          # block linear 1
    w2, b2 = lin(keys[4], keys[5], hidden, hidden)          # block linear 2
    wo, bo = lin(keys[6], keys[7], hidden, manifold)        # output_layer

    # BatchNorm params at init: gamma=1, beta=0, running_mean=0, running_var=1
    ones = jnp.ones((hidden,), jnp.float32)
    zeros = jnp.zeros((hidden,), jnp.float32)

    return {
        "wx": w_in[:manifold, :],
        "wy": w_in[manifold:manifold + dirsz, :],
        "wz": w_in[manifold + dirsz:, :],
        "bin": b_in,
        "w1": w1, "b1": b1, "g1": ones, "be1": zeros, "m1": zeros, "v1": ones,
        "w2": w2, "b2": b2, "g2": ones, "be2": zeros, "m2": zeros, "v2": ones,
        "wo": wo, "bo": bo,
    }


def reference_forward(x, y, z, params):
    """Plain-JAX reference with matching numerics (f32 BN fold, bf16 matmuls)."""
    folded = fold_params(params)
    bias = folded["biases"]
    xin = jnp.concatenate([x, y, z], axis=1).astype(jnp.float32)

    def mm(a, w):
        return jnp.dot(a.astype(jnp.bfloat16), w,
                       preferred_element_type=jnp.float32)

    h = mm(xin, folded["w_in"]) + bias[0]
    r = mm(h, folded["w1"]) + bias[1]
    r = jnp.where(r > 0, r, LEAKY_SLOPE * r)
    r = mm(r, folded["w2"]) + bias[2]
    h = jnp.where(r + h > 0, r + h, LEAKY_SLOPE * (r + h))
    out = mm(h, folded["wo"]) + bias[3]
    return out[:, :params["wo"].shape[1]]


if __name__ == "__main__":
    key = jax.random.PRNGKey(0)
    kx, ky, kz, kp = jax.random.split(key, 4)

    x = jax.random.normal(kx, (BATCH, MANIFOLD_SIZE), jnp.float32)
    y = jax.random.normal(ky, (BATCH, DIRECTION_THETAS_SIZE), jnp.float32)
    z = jax.random.normal(kz, (BATCH, DISTANCE_THETAS_SIZE), jnp.float32)
    params = init_params(kp)

    out = sdirdiststate_forward(x, y, z, params)
    out = jax.block_until_ready(out)

    ref = reference_forward(x, y, z, params)
    assert out.shape == (BATCH, MANIFOLD_SIZE)
    # bf16 MXU operands (f32 accumulation) in both kernel and reference.
    assert jnp.allclose(out, ref, atol=2e-2, rtol=2e-2)

    print("KERNEL_OK")
</pallas_src>

<mosaic_0001>
module attributes {stable_mosaic.version = 11 : i64} {
  func.func @sdirdiststate_kernel(%arg0: i32, %arg1: memref<8x64xf32, #tpu.memory_space<vmem>>, %arg2: memref<64x128xbf16, #tpu.memory_space<vmem>>, %arg3: memref<128x128xbf16, #tpu.memory_space<vmem>>, %arg4: memref<128x128xbf16, #tpu.memory_space<vmem>>, %arg5: memref<128x128xbf16, #tpu.memory_space<vmem>>, %arg6: memref<4x128xf32, #tpu.memory_space<vmem>>, %arg7: memref<8x128xf32, #tpu.memory_space<vmem>>) attributes {dimension_semantics = [#tpu.dimension_semantics<parallel>], iteration_bounds = array<i64: 1>, scalar_prefetch = 0 : i64, scratch_operands = 0 : i64, tpu.core_type = #tpu.core_type<tc>, window_params = [{transform_indices = @transform_0, window_bounds = array<i64: 8, 64>}, {pipeline_mode = #tpu.pipeline_mode<synchronous>, transform_indices = @transform_1, window_bounds = array<i64: 64, 128>}, {pipeline_mode = #tpu.pipeline_mode<synchronous>, transform_indices = @transform_2, window_bounds = array<i64: 128, 128>}, {pipeline_mode = #tpu.pipeline_mode<synchronous>, transform_indices = @transform_3, window_bounds = array<i64: 128, 128>}, {pipeline_mode = #tpu.pipeline_mode<synchronous>, transform_indices = @transform_4, window_bounds = array<i64: 128, 128>}, {pipeline_mode = #tpu.pipeline_mode<synchronous>, transform_indices = @transform_5, window_bounds = array<i64: 4, 128>}, {transform_indices = @transform_6, window_bounds = array<i64: 8, 128>}]} {
    %c0 = arith.constant 0 : index
    %c0_0 = arith.constant 0 : index
    %0 = vector.load %arg6[%c0, %c0_0] : memref<4x128xf32, #tpu.memory_space<vmem>>, vector<1x128xf32>
    %c1 = arith.constant 1 : index
    %c0_1 = arith.constant 0 : index
    %1 = vector.load %arg6[%c1, %c0_1] : memref<4x128xf32, #tpu.memory_space<vmem>>, vector<1x128xf32>
    %c2 = arith.constant 2 : index
    %c0_2 = arith.constant 0 : index
    %2 = vector.load %arg6[%c2, %c0_2] : memref<4x128xf32, #tpu.memory_space<vmem>>, vector<1x128xf32>
    %c3 = arith.constant 3 : index
    %c0_3 = arith.constant 0 : index
    %3 = vector.load %arg6[%c3, %c0_3] : memref<4x128xf32, #tpu.memory_space<vmem>>, vector<1x128xf32>
    %c0_4 = arith.constant 0 : index
    %c0_5 = arith.constant 0 : index
    %4 = vector.load %arg1[%c0_4, %c0_5] : memref<8x64xf32, #tpu.memory_space<vmem>>, vector<8x64xf32>
    %5 = arith.truncf %4 : vector<8x64xf32> to vector<8x64xbf16>
    %c0_6 = arith.constant 0 : index
    %c0_7 = arith.constant 0 : index
    %6 = vector.load %arg2[%c0_6, %c0_7] : memref<64x128xbf16, #tpu.memory_space<vmem>>, vector<64x128xbf16>
    %cst = arith.constant dense<0.000000e+00> : vector<8x128xf32>
    %7 = tpu.matmul %5, %6, %cst {dimension_numbers = #tpu.dot_dimension_numbers<[1], [0], [0], [1], [0, 0, 1, 1], [], []>} : vector<8x64xbf16>, vector<64x128xbf16>, vector<8x128xf32> -> vector<8x128xf32>
    %8 = vector.broadcast %0 : vector<1x128xf32> to vector<8x128xf32>
    %9 = arith.addf %7, %8 : vector<8x128xf32>
    %10 = arith.truncf %9 : vector<8x128xf32> to vector<8x128xbf16>
    %c0_8 = arith.constant 0 : index
    %c0_9 = arith.constant 0 : index
    %11 = vector.load %arg3[%c0_8, %c0_9] : memref<128x128xbf16, #tpu.memory_space<vmem>>, vector<128x128xbf16>
    %cst_10 = arith.constant dense<0.000000e+00> : vector<8x128xf32>
    %12 = tpu.matmul %10, %11, %cst_10 {dimension_numbers = #tpu.dot_dimension_numbers<[1], [0], [0], [1], [0, 0, 1, 1], [], []>} : vector<8x128xbf16>, vector<128x128xbf16>, vector<8x128xf32> -> vector<8x128xf32>
    %13 = vector.broadcast %1 : vector<1x128xf32> to vector<8x128xf32>
    %14 = arith.addf %12, %13 : vector<8x128xf32>
    %cst_11 = arith.constant 0.000000e+00 : f32
    %15 = vector.broadcast %cst_11 : f32 to vector<8x128xf32>
    %16 = arith.cmpf ogt, %14, %15 : vector<8x128xf32>
    %cst_12 = arith.constant 0.00999999977 : f32
    %17 = vector.broadcast %cst_12 : f32 to vector<8x128xf32>
    %18 = arith.mulf %17, %14 : vector<8x128xf32>
    %19 = arith.select %16, %14, %18 : vector<8x128xi1>, vector<8x128xf32>
    %20 = arith.truncf %19 : vector<8x128xf32> to vector<8x128xbf16>
    %c0_13 = arith.constant 0 : index
    %c0_14 = arith.constant 0 : index
    %21 = vector.load %arg4[%c0_13, %c0_14] : memref<128x128xbf16, #tpu.memory_space<vmem>>, vector<128x128xbf16>
    %cst_15 = arith.constant dense<0.000000e+00> : vector<8x128xf32>
    %22 = tpu.matmul %20, %21, %cst_15 {dimension_numbers = #tpu.dot_dimension_numbers<[1], [0], [0], [1], [0, 0, 1, 1], [], []>} : vector<8x128xbf16>, vector<128x128xbf16>, vector<8x128xf32> -> vector<8x128xf32>
    %23 = vector.broadcast %2 : vector<1x128xf32> to vector<8x128xf32>
    %24 = arith.addf %22, %23 : vector<8x128xf32>
    %25 = arith.addf %24, %9 : vector<8x128xf32>
    %cst_16 = arith.constant 0.000000e+00 : f32
    %26 = vector.broadcast %cst_16 : f32 to vector<8x128xf32>
    %27 = arith.cmpf ogt, %25, %26 : vector<8x128xf32>
    %cst_17 = arith.constant 0.00999999977 : f32
    %28 = vector.broadcast %cst_17 : f32 to vector<8x128xf32>
    %29 = arith.mulf %28, %25 : vector<8x128xf32>
    %30 = arith.select %27, %25, %29 : vector<8x128xi1>, vector<8x128xf32>
    %31 = arith.truncf %30 : vector<8x128xf32> to vector<8x128xbf16>
    %c0_18 = arith.constant 0 : index
    %c0_19 = arith.constant 0 : index
    %32 = vector.load %arg5[%c0_18, %c0_19] : memref<128x128xbf16, #tpu.memory_space<vmem>>, vector<128x128xbf16>
    %cst_20 = arith.constant dense<0.000000e+00> : vector<8x128xf32>
    %33 = tpu.matmul %31, %32, %cst_20 {dimension_numbers = #tpu.dot_dimension_numbers<[1], [0], [0], [1], [0, 0, 1, 1], [], []>} : vector<8x128xbf16>, vector<128x128xbf16>, vector<8x128xf32> -> vector<8x128xf32>
    %34 = vector.broadcast %3 : vector<1x128xf32> to vector<8x128xf32>
    %35 = arith.addf %33, %34 : vector<8x128xf32>
    %c0_21 = arith.constant 0 : index
    %c0_22 = arith.constant 0 : index
    %36 = vector.load %arg7[%c0_21, %c0_22] : memref<8x128xf32, #tpu.memory_space<vmem>>, vector<8x128xf32>
    tpu.vector_store %arg7[%c0_21, %c0_22], %35 {strides = array<i32>} : memref<8x128xf32, #tpu.memory_space<vmem>>, vector<8x128xf32>,
    return
  }
  func.func @transform_0(%arg0: i32) -> (i32, i32) {
    %c0_i32 = arith.constant 0 : i32
    %c0_i32_0 = arith.constant 0 : i32
    return %arg0, %c0_i32 : i32, i32
  }
  func.func @transform_1(%arg0: i32) -> (i32, i32) {
    %c0_i32 = arith.constant 0 : i32
    %c0_i32_0 = arith.constant 0 : i32
    %c0_i32_1 = arith.constant 0 : i32
    return %c0_i32, %c0_i32_0 : i32, i32
  }
  func.func @transform_2(%arg0: i32) -> (i32, i32) {
    %c0_i32 = arith.constant 0 : i32
    %c0_i32_0 = arith.constant 0 : i32
    %c0_i32_1 = arith.constant 0 : i32
    return %c0_i32, %c0_i32_0 : i32, i32
  }
  func.func @transform_3(%arg0: i32) -> (i32, i32) {
    %c0_i32 = arith.constant 0 : i32
    %c0_i32_0 = arith.constant 0 : i32
    %c0_i32_1 = arith.constant 0 : i32
    return %c0_i32, %c0_i32_0 : i32, i32
  }
  func.func @transform_4(%arg0: i32) -> (i32, i32) {
    %c0_i32 = arith.constant 0 : i32
    %c0_i32_0 = arith.constant 0 : i32
    %c0_i32_1 = arith.constant 0 : i32
    return %c0_i32, %c0_i32_0 : i32, i32
  }
  func.func @transform_5(%arg0: i32) -> (i32, i32) {
    %c0_i32 = arith.constant 0 : i32
    %c0_i32_0 = arith.constant 0 : i32
    %c0_i32_1 = arith.constant 0 : i32
    return %c0_i32, %c0_i32_0 : i32, i32
  }
  func.func @transform_6(%arg0: i32) -> (i32, i32) {
    %c0_i32 = arith.constant 0 : i32
    %c0_i32_0 = arith.constant 0 : i32
    return %arg0, %c0_i32 : i32, i32
  }
}

</mosaic_0001>

<llo_original>
// kernel: tpu_custom_call.1
$region0: #{tpu_custom_call.1}
  #allocation0 [shape = 'u32[]', space=smem, size = 0x4, offset = 0x4, fixed_abs, tag = 'smem constant byte address 0x4 - core index']
  #allocation1 [shape = 'u32[144,128]{1,0:T(1,128)}', space=vmem, size = 0x12000, scoped, tag = 'internal scratch']
  %s0 = inlined_call_operand.hbm [shape: f32[8,64], index: 0, kind: input, shape index: {}]
  %s1 = inlined_call_operand.hbm [shape: bf16[64,128], index: 1, kind: input, shape index: {}]
  %s2 = inlined_call_operand.hbm [shape: bf16[128,128], index: 2, kind: input, shape index: {}]
  %s3 = inlined_call_operand.hbm [shape: bf16[128,128], index: 3, kind: input, shape index: {}]
  %s4 = inlined_call_operand.hbm [shape: bf16[128,128], index: 4, kind: input, shape index: {}]
  %s5 = inlined_call_operand.vmem [shape: f32[4,128], index: 5, kind: input, shape index: {}]
  %s6 = inlined_call_operand.hbm [shape: f32[8,128], index: 6, kind: output, shape index: {}]
  %s7 = sld [smem:[#allocation0]]
  $region54: #{tpu_custom_call.1} parent=0
    _
  %s9 = ssub.s32 1, %s7
  %s10 = scalar_select 0, %s9, %s7
  $region1: #{tpu_custom_call.1} parent=0
    #allocation2 [shape = 'u8[4096]{0}', space=vmem, size = 0x1000, scoped, tag = 'input window, operand 0, single buffered']
    #allocation3 [shape = 's32[1]{0}', space=sflag, size = 0x4, scoped, tag = 'scoped memory for tpu_custom_call.1']
    #allocation4 [shape = 's32[1]{0}', space=sflag, size = 0x4, scoped, tag = 'scoped memory for tpu_custom_call.1']
    #allocation5 [shape = 'u8[16384]{0}', space=vmem, size = 0x4000, scoped, tag = 'input window, operand 1, single buffered']
    #allocation6 [shape = 's32[1]{0}', space=sflag, size = 0x4, scoped, tag = 'scoped memory for tpu_custom_call.1']
    #allocation7 [shape = 'u8[32768]{0}', space=vmem, size = 0x8000, scoped, tag = 'input window, operand 2, single buffered']
    #allocation8 [shape = 'u8[32768]{0}', space=vmem, size = 0x8000, scoped, tag = 'input window, operand 3, single buffered']
    #allocation9 [shape = 's32[1]{0}', space=sflag, size = 0x4, scoped, tag = 'scoped memory for tpu_custom_call.1']
    #allocation10 [shape = 'u8[32768]{0}', space=vmem, size = 0x8000, scoped, tag = 'input window, operand 4, single buffered']
    #allocation11 [shape = 'u8[4096]{0}', space=vmem, size = 0x1000, scoped, tag = 'output window, operand 0, single buffered']
    %11 = vsyncpa [#allocation3], 0
    %12 = vsyncpa [#allocation6], 0
    %13 = vsyncpa [#allocation9], 0
    %14 = vsyncpa [#allocation4], 0
    // Predicated region
    $region2: #{tpu_custom_call.1} parent=1 // pred_check
      _
    $region3: #{tpu_custom_call.1} parent=1 // pred_check_branch
      %16 = sbr.rel (0) target = $region5
    $region4: #{tpu_custom_call.1} parent=1 // pred_region
      %s18 = ssub.s32 128, 128
      %19 = vsyncadd [#allocation3], %s18
      %s21 = sshll.u32 [#allocation2], 4
      %s22 = int_to_ptr.vmem [resolvable:$true] %s21
      %24 = dma.hbm_to_vmem [thread:$0]  %s0, 128, %s22, [#allocation3]
    $region5: #{tpu_custom_call.1} parent=1 // pred_fallthru
      _
    // Predicated region
    $region6: #{tpu_custom_call.1} parent=1 // pred_check
      _
    $region7: #{tpu_custom_call.1} parent=1 // pred_check_branch
      %26 = sbr.rel (0) target = $region9
    $region8: #{tpu_custom_call.1} parent=1 // pred_region
      %s28 = ssub.s32 512, 512
      %29 = vsyncadd [#allocation6], %s28
      %s30 = sshll.u32 [#allocation5], 4
      %s31 = int_to_ptr.vmem [resolvable:$true] %s30
      %36 = dma.hbm_to_vmem [thread:$0]  %s1, 512, %s31, [#allocation6], 64, 64, 4
    $region9: #{tpu_custom_call.1} parent=1 // pred_fallthru
      _
    // Predicated region
    $region10: #{tpu_custom_call.1} parent=1 // pred_check
      _
    $region11: #{tpu_custom_call.1} parent=1 // pred_check_branch
      %38 = sbr.rel (0) target = $region13
    $region12: #{tpu_custom_call.1} parent=1 // pred_region
      %s40 = ssub.s32 1024, 1024
      %41 = vsyncadd [#allocation6], %s40
      %s42 = sshll.u32 [#allocation7], 4
      %s43 = int_to_ptr.vmem [resolvable:$true] %s42
      %48 = dma.hbm_to_vmem [thread:$0]  %s2, 1024, %s43, [#allocation6], 64, 64, 4
    $region13: #{tpu_custom_call.1} parent=1 // pred_fallthru
      _
    // Predicated region
    $region14: #{tpu_custom_call.1} parent=1 // pred_check
      _
    $region15: #{tpu_custom_call.1} parent=1 // pred_check_branch
      %50 = sbr.rel (0) target = $region17
    $region16: #{tpu_custom_call.1} parent=1 // pred_region
      %s52 = ssub.s32 1024, 1024
      %53 = vsyncadd [#allocation9], %s52
      %s54 = sshll.u32 [#allocation8], 4
      %s55 = int_to_ptr.vmem [resolvable:$true] %s54
      %60 = dma.hbm_to_vmem [thread:$0]  %s3, 1024, %s55, [#allocation9], 64, 64, 4
    $region17: #{tpu_custom_call.1} parent=1 // pred_fallthru
      _
    // Predicated region
    $region18: #{tpu_custom_call.1} parent=1 // pred_check
      _
    $region19: #{tpu_custom_call.1} parent=1 // pred_check_branch
      %62 = sbr.rel (0) target = $region21
    $region20: #{tpu_custom_call.1} parent=1 // pred_region
      %s64 = ssub.s32 1024, 1024
      %65 = vsyncadd [#allocation9], %s64
      %s66 = sshll.u32 [#allocation10], 4
      %s67 = int_to_ptr.vmem [resolvable:$true] %s66
      %72 = dma.hbm_to_vmem [thread:$0]  %s4, 1024, %s67, [#allocation9], 64, 64, 4
    $region21: #{tpu_custom_call.1} parent=1 // pred_fallthru
      _
    // Predicated region
    $region22: #{tpu_custom_call.1} parent=1 // pred_check
      _
    $region23: #{tpu_custom_call.1} parent=1 // pred_check_branch
      %74 = sbr.rel (0) target = $region25
    $region24: #{tpu_custom_call.1} parent=1 // pred_region
      _
    $region25: #{tpu_custom_call.1} parent=1 // pred_fallthru
      _
    // Predicated region
    $region26: #{tpu_custom_call.1} parent=1 // pred_check
      _
    $region27: #{tpu_custom_call.1} parent=1 // pred_check_branch
      %76 = sbr.rel (0) target = $region29
    $region28: #{tpu_custom_call.1} parent=1 // pred_region
      %77 = dma.done [#allocation3], 128
    $region29: #{tpu_custom_call.1} parent=1 // pred_fallthru
      _
    // Predicated region
    $region30: #{tpu_custom_call.1} parent=1 // pred_check
      _
    $region31: #{tpu_custom_call.1} parent=1 // pred_check_branch
      %79 = sbr.rel (0) target = $region33
    $region32: #{tpu_custom_call.1} parent=1 // pred_region
      %80 = dma.done [#allocation6], 512
    $region33: #{tpu_custom_call.1} parent=1 // pred_fallthru
      _
    // Predicated region
    $region34: #{tpu_custom_call.1} parent=1 // pred_check
      _
    $region35: #{tpu_custom_call.1} parent=1 // pred_check_branch
      %82 = sbr.rel (0) target = $region37
    $region36: #{tpu_custom_call.1} parent=1 // pred_region
      %83 = dma.done [#allocation6], 1024
    $region37: #{tpu_custom_call.1} parent=1 // pred_fallthru
      _
    // Predicated region
    $region38: #{tpu_custom_call.1} parent=1 // pred_check
      _
    $region39: #{tpu_custom_call.1} parent=1 // pred_check_branch
      %85 = sbr.rel (0) target = $region41
    $region40: #{tpu_custom_call.1} parent=1 // pred_region
      %86 = dma.done [#allocation9], 1024
    $region41: #{tpu_custom_call.1} parent=1 // pred_fallthru
      _
    // Predicated region
    $region42: #{tpu_custom_call.1} parent=1 // pred_check
      _
    $region43: #{tpu_custom_call.1} parent=1 // pred_check_branch
      %88 = sbr.rel (0) target = $region45
    $region44: #{tpu_custom_call.1} parent=1 // pred_region
      %89 = dma.done [#allocation9], 1024
    $region45: #{tpu_custom_call.1} parent=1 // pred_fallthru
      _
    %v91 = vld [vmem:[%s5] sm:$0x1]
    %v92 = vld [vmem:[%s5 + $0x1] sm:$0x1]
    %v93 = vld [vmem:[%s5 + $0x2] sm:$0x1]
    %v94 = vld [vmem:[%s5 + $0x3] sm:$0x1]
    %v95 = vld [vmem:[#allocation2] sm:$0xff]
    %v96 = vpack.c.bf16 %v95, %v95
    %v97 = vld [vmem:[#allocation5] sm:$0xf]
    %v98 = vld [vmem:[#allocation5 + $0x4] sm:$0xf]
    %v99 = vld [vmem:[#allocation5 + $0x8] sm:$0xf]
    %v100 = vld [vmem:[#allocation5 + $0xc] sm:$0xf]
    %v101 = vld [vmem:[#allocation5 + $0x10] sm:$0xf]
    %v102 = vld [vmem:[#allocation5 + $0x14] sm:$0xf]
    %v103 = vld [vmem:[#allocation5 + $0x18] sm:$0xf]
    %v104 = vld [vmem:[#allocation5 + $0x1c] sm:$0xf]
    %v105 = vlaneseq
    %v106 = vshrl.u32 %v105, 7
    %v107 = vsub.s32 0, %v106
    %v108 = vrot.slane %v91, %v107
    %v117 = vunpack.c.l.b16 %v97
    %v118 = vunpack.c.l.b16 %v98
    %v119 = vunpack.c.l.b16 %v99
    %v120 = vunpack.c.l.b16 %v100
    %v121 = vunpack.c.l.b16 %v101
    %v122 = vunpack.c.l.b16 %v102
    %v123 = vunpack.c.l.b16 %v103
    %v124 = vunpack.c.l.b16 %v104
    %v125 = vpack.c.b16 %v118, %v117
    %v126 = vpack.c.b16 %v120, %v119
    %v127 = vpack.c.b16 %v122, %v121
    %v128 = vpack.c.b16 %v124, %v123
    %vm133 = vcmask 523264
    %v135 = vsel %vm133, %v96, 0
    %137 = vmatprep.subr.bf16.mxu0 0
    %138 = vmatpush1.bf16.msra.mxu0 %v125
    %139 = vmatprep.subr.bf16.mxu0 0
    %140 = vmatpush1.bf16.msra.mxu0 %v126
    %141 = vmatprep.subr.bf16.mxu0 0
    %142 = vmatpush1.bf16.msra.mxu0 %v127
    %143 = vmatprep.subr.bf16.mxu0 0
    %144 = vmatpush1.bf16.msra.mxu0 %v128
    %145 = vmatprep.subr.bf16.mxu0 0
    %146 = vmatpush1.bf16.msra.mxu0 0
    %147 = vmatprep.subr.bf16.mxu0 0
    %148 = vmatpush1.bf16.msra.mxu0 0
    %149 = vmatprep.subr.bf16.mxu0 0
    %150 = vmatpush1.bf16.msra.mxu0 0
    %151 = vmatprep.subr.bf16.mxu0 0
    %152 = vmatpush1.bf16.msra.mxu0 0
    %153 = vmatprep.subr.bf16.mxu0 0
    %154 = vmatpush1.bf16.msra.mxu0 0
    %155 = vmatprep.subr.bf16.mxu0 0
    %156 = vmatpush1.bf16.msra.mxu0 0
    %157 = vmatprep.subr.bf16.mxu0 0
    %158 = vmatpush1.bf16.msra.mxu0 0
    %159 = vmatprep.subr.bf16.mxu0 0
    %160 = vmatpush1.bf16.msra.mxu0 0
    %161 = vmatprep.subr.bf16.mxu0 0
    %162 = vmatpush1.bf16.msra.mxu0 0
    %163 = vmatprep.subr.bf16.mxu0 0
    %164 = vmatpush1.bf16.msra.mxu0 0
    %165 = vmatprep.subr.bf16.mxu0 0
    %166 = vmatpush1.bf16.msra.mxu0 0
    %167 = vmatprep.subr.bf16.mxu0 0
    %168 = vmatpush1.bf16.msra.mxu0 0
    %169 = vmatprep.mubr.bf16.mxu0 0
    %170 = vmatmul.mubr.bf16.gmra.mrb[0].mxu0 %v135
    %v171 = vpop.f32.mrb[0].mxu0
    %v172 = vadd.f32 %v108, %v171
    %v173 = vpop.f32.mrb[0].mxu0
    %v174 = vpop.f32.mrb[0].mxu0
    %v175 = vpop.f32.mrb[0].mxu0
    %176 = vdwg.mxu0
    %v177 = vpack.c.bf16 %v172, %v172
    %v178 = vld [vmem:[#allocation7] sm:$0xf]
    %v179 = vld [vmem:[#allocation7 + $0x4] sm:$0xf]
    %v180 = vld [vmem:[#allocation7 + $0x8] sm:$0xf]
    %v181 = vld [vmem:[#allocation7 + $0xc] sm:$0xf]
    %v182 = vld [vmem:[#allocation7 + $0x10] sm:$0xf]
    %v183 = vld [vmem:[#allocation7 + $0x14] sm:$0xf]
    %v184 = vld [vmem:[#allocation7 + $0x18] sm:$0xf]
    %v185 = vld [vmem:[#allocation7 + $0x1c] sm:$0xf]
    %v186 = vld [vmem:[#allocation7 + $0x20] sm:$0xf]
    %v187 = vld [vmem:[#allocation7 + $0x24] sm:$0xf]
    %v188 = vld [vmem:[#allocation7 + $0x28] sm:$0xf]
    %v189 = vld [vmem:[#allocation7 + $0x2c] sm:$0xf]
    %v190 = vld [vmem:[#allocation7 + $0x30] sm:$0xf]
    %v191 = vld [vmem:[#allocation7 + $0x34] sm:$0xf]
    %v192 = vld [vmem:[#allocation7 + $0x38] sm:$0xf]
    %v193 = vld [vmem:[#allocation7 + $0x3c] sm:$0xf]
    %v194 = vlaneseq
    %v195 = vshrl.u32 %v194, 7
    %v196 = vsub.s32 0, %v195
    %v197 = vrot.slane %v92, %v196
    %v214 = vunpack.c.l.b16 %v178
    %v215 = vunpack.c.l.b16 %v179
    %v216 = vunpack.c.l.b16 %v180
    %v217 = vunpack.c.l.b16 %v181
    %v218 = vunpack.c.l.b16 %v182
    %v219 = vunpack.c.l.b16 %v183
    %v220 = vunpack.c.l.b16 %v184
    %v221 = vunpack.c.l.b16 %v185
    %v222 = vunpack.c.l.b16 %v186
    %v223 = vunpack.c.l.b16 %v187
    %v224 = vunpack.c.l.b16 %v188
    %v225 = vunpack.c.l.b16 %v189
    %v226 = vunpack.c.l.b16 %v190
    %v227 = vunpack.c.l.b16 %v191
    %v228 = vunpack.c.l.b16 %v192
    %v229 = vunpack.c.l.b16 %v193
    %v230 = vpack.c.b16 %v215, %v214
    %v231 = vpack.c.b16 %v217, %v216
    %v232 = vpack.c.b16 %v219, %v218
    %v233 = vpack.c.b16 %v221, %v220
    %v234 = vpack.c.b16 %v223, %v222
    %v235 = vpack.c.b16 %v225, %v224
    %v236 = vpack.c.b16 %v227, %v226
    %v237 = vpack.c.b16 %v229, %v228
    %246 = vmatprep.subr.bf16.mxu0 0
    %247 = vmatpush1.bf16.msra.mxu0 %v230
    %248 = vmatprep.subr.bf16.mxu0 0
    %249 = vmatpush1.bf16.msra.mxu0 %v231
    %250 = vmatprep.subr.bf16.mxu0 0
    %251 = vmatpush1.bf16.msra.mxu0 %v232
    %252 = vmatprep.subr.bf16.mxu0 0
    %253 = vmatpush1.bf16.msra.mxu0 %v233
    %254 = vmatprep.subr.bf16.mxu0 0
    %255 = vmatpush1.bf16.msra.mxu0 %v234
    %256 = vmatprep.subr.bf16.mxu0 0
    %257 = vmatpush1.bf16.msra.mxu0 %v235
    %258 = vmatprep.subr.bf16.mxu0 0
    %259 = vmatpush1.bf16.msra.mxu0 %v236
    %260 = vmatprep.subr.bf16.mxu0 0
    %261 = vmatpush1.bf16.msra.mxu0 %v237
    %262 = vmatprep.subr.bf16.mxu0 0
    %263 = vmatpush1.bf16.msra.mxu0 0
    %264 = vmatprep.subr.bf16.mxu0 0
    %265 = vmatpush1.bf16.msra.mxu0 0
    %266 = vmatprep.subr.bf16.mxu0 0
    %267 = vmatpush1.bf16.msra.mxu0 0
    %268 = vmatprep.subr.bf16.mxu0 0
    %269 = vmatpush1.bf16.msra.mxu0 0
    %270 = vmatprep.subr.bf16.mxu0 0
    %271 = vmatpush1.bf16.msra.mxu0 0
    %272 = vmatprep.subr.bf16.mxu0 0
    %273 = vmatpush1.bf16.msra.mxu0 0
    %274 = vmatprep.subr.bf16.mxu0 0
    %275 = vmatpush1.bf16.msra.mxu0 0
    %276 = vmatprep.subr.bf16.mxu0 0
    %277 = vmatpush1.bf16.msra.mxu0 0
    %278 = vmatprep.mubr.bf16.mxu0 0
    %279 = vmatmul.mubr.bf16.gmra.mrb[0].mxu0 %v177
    %v280 = vpop.f32.mrb[0].mxu0
    %v281 = vadd.f32 %v197, %v280
    %v282 = vpop.f32.mrb[0].mxu0
    %v283 = vpop.f32.mrb[0].mxu0
    %v284 = vpop.f32.mrb[0].mxu0
    %285 = vdwg.mxu0
    %vm286 = vcmp.gt.f32.partialorder %v281, 0.0
    %v287 = vmul.f32 %v281, 0.01
    %v288 = vsel %vm286, %v281, %v287
    %v289 = vpack.c.bf16 %v288, %v288
    %v290 = vld [vmem:[#allocation8] sm:$0xf]
    %v291 = vld [vmem:[#allocation8 + $0x4] sm:$0xf]
    %v292 = vld [vmem:[#allocation8 + $0x8] sm:$0xf]
    %v293 = vld [vmem:[#allocation8 + $0xc] sm:$0xf]
    %v294 = vld [vmem:[#allocation8 + $0x10] sm:$0xf]
    %v295 = vld [vmem:[#allocation8 + $0x14] sm:$0xf]
    %v296 = vld [vmem:[#allocation8 + $0x18] sm:$0xf]
    %v297 = vld [vmem:[#allocation8 + $0x1c] sm:$0xf]
    %v298 = vld [vmem:[#allocation8 + $0x20] sm:$0xf]
    %v299 = vld [vmem:[#allocation8 + $0x24] sm:$0xf]
    %v300 = vld [vmem:[#allocation8 + $0x28] sm:$0xf]
    %v301 = vld [vmem:[#allocation8 + $0x2c] sm:$0xf]
    %v302 = vld [vmem:[#allocation8 + $0x30] sm:$0xf]
    %v303 = vld [vmem:[#allocation8 + $0x34] sm:$0xf]
    %v304 = vld [vmem:[#allocation8 + $0x38] sm:$0xf]
    %v305 = vld [vmem:[#allocation8 + $0x3c] sm:$0xf]
    %v306 = vlaneseq
    %v307 = vshrl.u32 %v306, 7
    %v308 = vsub.s32 0, %v307
    %v309 = vrot.slane %v93, %v308
    %v326 = vunpack.c.l.b16 %v290
    %v327 = vunpack.c.l.b16 %v291
    %v328 = vunpack.c.l.b16 %v292
    %v329 = vunpack.c.l.b16 %v293
    %v330 = vunpack.c.l.b16 %v294
    %v331 = vunpack.c.l.b16 %v295
    %v332 = vunpack.c.l.b16 %v296
    %v333 = vunpack.c.l.b16 %v297
    %v334 = vunpack.c.l.b16 %v298
    %v335 = vunpack.c.l.b16 %v299
    %v336 = vunpack.c.l.b16 %v300
    %v337 = vunpack.c.l.b16 %v301
    %v338 = vunpack.c.l.b16 %v302
    %v339 = vunpack.c.l.b16 %v303
    %v340 = vunpack.c.l.b16 %v304
    %v341 = vunpack.c.l.b16 %v305
    %v342 = vpack.c.b16 %v327, %v326
    %v343 = vpack.c.b16 %v329, %v328
    %v344 = vpack.c.b16 %v331, %v330
    %v345 = vpack.c.b16 %v333, %v332
    %v346 = vpack.c.b16 %v335, %v334
    %v347 = vpack.c.b16 %v337, %v336
    %v348 = vpack.c.b16 %v339, %v338
    %v349 = vpack.c.b16 %v341, %v340
    %358 = vmatprep.subr.bf16.mxu0 0
    %359 = vmatpush1.bf16.msra.mxu0 %v342
    %360 = vmatprep.subr.bf16.mxu0 0
    %361 = vmatpush1.bf16.msra.mxu0 %v343
    %362 = vmatprep.subr.bf16.mxu0 0
    %363 = vmatpush1.bf16.msra.mxu0 %v344
    %364 = vmatprep.subr.bf16.mxu0 0
    %365 = vmatpush1.bf16.msra.mxu0 %v345
    %366 = vmatprep.subr.bf16.mxu0 0
    %367 = vmatpush1.bf16.msra.mxu0 %v346
    %368 = vmatprep.subr.bf16.mxu0 0
    %369 = vmatpush1.bf16.msra.mxu0 %v347
    %370 = vmatprep.subr.bf16.mxu0 0
    %371 = vmatpush1.bf16.msra.mxu0 %v348
    %372 = vmatprep.subr.bf16.mxu0 0
    %373 = vmatpush1.bf16.msra.mxu0 %v349
    %374 = vmatprep.subr.bf16.mxu0 0
    %375 = vmatpush1.bf16.msra.mxu0 0
    %376 = vmatprep.subr.bf16.mxu0 0
    %377 = vmatpush1.bf16.msra.mxu0 0
    %378 = vmatprep.subr.bf16.mxu0 0
    %379 = vmatpush1.bf16.msra.mxu0 0
    %380 = vmatprep.subr.bf16.mxu0 0
    %381 = vmatpush1.bf16.msra.mxu0 0
    %382 = vmatprep.subr.bf16.mxu0 0
    %383 = vmatpush1.bf16.msra.mxu0 0
    %384 = vmatprep.subr.bf16.mxu0 0
    %385 = vmatpush1.bf16.msra.mxu0 0
    %386 = vmatprep.subr.bf16.mxu0 0
    %387 = vmatpush1.bf16.msra.mxu0 0
    %388 = vmatprep.subr.bf16.mxu0 0
    %389 = vmatpush1.bf16.msra.mxu0 0
    %390 = vmatprep.mubr.bf16.mxu0 0
    %391 = vmatmul.mubr.bf16.gmra.mrb[0].mxu0 %v289
    %v392 = vpop.f32.mrb[0].mxu0
    %v393 = vadd.f32 %v309, %v392
    %v394 = vpop.f32.mrb[0].mxu0
    %v395 = vpop.f32.mrb[0].mxu0
    %v396 = vpop.f32.mrb[0].mxu0
    %397 = vdwg.mxu0
    %v398 = vadd.f32 %v393, %v172
    %vm399 = vcmp.gt.f32.partialorder %v398, 0.0
    %v400 = vmul.f32 %v398, 0.01
    %v401 = vsel %vm399, %v398, %v400
    %v402 = vpack.c.bf16 %v401, %v401
    %v403 = vld [vmem:[#allocation10] sm:$0xf]
    %v404 = vld [vmem:[#allocation10 + $0x4] sm:$0xf]
    %v405 = vld [vmem:[#allocation10 + $0x8] sm:$0xf]
    %v406 = vld [vmem:[#allocation10 + $0xc] sm:$0xf]
    %v407 = vld [vmem:[#allocation10 + $0x10] sm:$0xf]
    %v408 = vld [vmem:[#allocation10 + $0x14] sm:$0xf]
    %v409 = vld [vmem:[#allocation10 + $0x18] sm:$0xf]
    %v410 = vld [vmem:[#allocation10 + $0x1c] sm:$0xf]
    %v411 = vld [vmem:[#allocation10 + $0x20] sm:$0xf]
    %v412 = vld [vmem:[#allocation10 + $0x24] sm:$0xf]
    %v413 = vld [vmem:[#allocation10 + $0x28] sm:$0xf]
    %v414 = vld [vmem:[#allocation10 + $0x2c] sm:$0xf]
    %v415 = vld [vmem:[#allocation10 + $0x30] sm:$0xf]
    %v416 = vld [vmem:[#allocation10 + $0x34] sm:$0xf]
    %v417 = vld [vmem:[#allocation10 + $0x38] sm:$0xf]
    %v418 = vld [vmem:[#allocation10 + $0x3c] sm:$0xf]
    %v419 = vlaneseq
    %v420 = vshrl.u32 %v419, 7
    %v421 = vsub.s32 0, %v420
    %v422 = vrot.slane %v94, %v421
    %v439 = vunpack.c.l.b16 %v403
    %v440 = vunpack.c.l.b16 %v404
    %v441 = vunpack.c.l.b16 %v405
    %v442 = vunpack.c.l.b16 %v406
    %v443 = vunpack.c.l.b16 %v407
    %v444 = vunpack.c.l.b16 %v408
    %v445 = vunpack.c.l.b16 %v409
    %v446 = vunpack.c.l.b16 %v410
    %v447 = vunpack.c.l.b16 %v411
    %v448 = vunpack.c.l.b16 %v412
    %v449 = vunpack.c.l.b16 %v413
    %v450 = vunpack.c.l.b16 %v414
    %v451 = vunpack.c.l.b16 %v415
    %v452 = vunpack.c.l.b16 %v416
    %v453 = vunpack.c.l.b16 %v417
    %v454 = vunpack.c.l.b16 %v418
    %v455 = vpack.c.b16 %v440, %v439
    %v456 = vpack.c.b16 %v442, %v441
    %v457 = vpack.c.b16 %v444, %v443
    %v458 = vpack.c.b16 %v446, %v445
    %v459 = vpack.c.b16 %v448, %v447
    %v460 = vpack.c.b16 %v450, %v449
    %v461 = vpack.c.b16 %v452, %v451
    %v462 = vpack.c.b16 %v454, %v453
    %471 = vmatprep.subr.bf16.mxu0 0
    %472 = vmatpush1.bf16.msra.mxu0 %v455
    %473 = vmatprep.subr.bf16.mxu0 0
    %474 = vmatpush1.bf16.msra.mxu0 %v456
    %475 = vmatprep.subr.bf16.mxu0 0
    %476 = vmatpush1.bf16.msra.mxu0 %v457
    %477 = vmatprep.subr.bf16.mxu0 0
    %478 = vmatpush1.bf16.msra.mxu0 %v458
    %479 = vmatprep.subr.bf16.mxu0 0
    %480 = vmatpush1.bf16.msra.mxu0 %v459
    %481 = vmatprep.subr.bf16.mxu0 0
    %482 = vmatpush1.bf16.msra.mxu0 %v460
    %483 = vmatprep.subr.bf16.mxu0 0
    %484 = vmatpush1.bf16.msra.mxu0 %v461
    %485 = vmatprep.subr.bf16.mxu0 0
    %486 = vmatpush1.bf16.msra.mxu0 %v462
    %487 = vmatprep.subr.bf16.mxu0 0
    %488 = vmatpush1.bf16.msra.mxu0 0
    %489 = vmatprep.subr.bf16.mxu0 0
    %490 = vmatpush1.bf16.msra.mxu0 0
    %491 = vmatprep.subr.bf16.mxu0 0
    %492 = vmatpush1.bf16.msra.mxu0 0
    %493 = vmatprep.subr.bf16.mxu0 0
    %494 = vmatpush1.bf16.msra.mxu0 0
    %495 = vmatprep.subr.bf16.mxu0 0
    %496 = vmatpush1.bf16.msra.mxu0 0
    %497 = vmatprep.subr.bf16.mxu0 0
    %498 = vmatpush1.bf16.msra.mxu0 0
    %499 = vmatprep.subr.bf16.mxu0 0
    %500 = vmatpush1.bf16.msra.mxu0 0
    %501 = vmatprep.subr.bf16.mxu0 0
    %502 = vmatpush1.bf16.msra.mxu0 0
    %503 = vmatprep.mubr.bf16.mxu0 0
    %504 = vmatmul.mubr.bf16.gmra.mrb[0].mxu0 %v402
    %v505 = vpop.f32.mrb[0].mxu0
    %v506 = vadd.f32 %v422, %v505
    %v507 = vpop.f32.mrb[0].mxu0
    %v508 = vpop.f32.mrb[0].mxu0
    %v509 = vpop.f32.mrb[0].mxu0
    %510 = vdwg.mxu0
    %511 = vst [vmem:[#allocation11] sm:$0xff] %v506
    // Predicated region
    $region46: #{tpu_custom_call.1} parent=1 // pred_check
      _
    $region47: #{tpu_custom_call.1} parent=1 // pred_check_branch
      %513 = sbr.rel (0) target = $region49
    $region48: #{tpu_custom_call.1} parent=1 // pred_region
      %s515 = ssub.s32 128, 128
      %516 = vsyncadd [#allocation4], %s515
      %s518 = sshll.u32 [#allocation11], 4
      %s519 = int_to_ptr.vmem [resolvable:$true] %s518
      %521 = dma.vmem_to_hbm [thread:$0]  %s519, 128, %s6, [#allocation4]
    $region49: #{tpu_custom_call.1} parent=1 // pred_fallthru
      _
    // Predicated region
    $region50: #{tpu_custom_call.1} parent=1 // pred_check
      _
    $region51: #{tpu_custom_call.1} parent=1 // pred_check_branch
      %523 = sbr.rel (0) target = $region53
    $region52: #{tpu_custom_call.1} parent=1 // pred_region
      %524 = dma.done [#allocation4], 128
    $region53: #{tpu_custom_call.1} parent=1 // pred_fallthru
      _
    %525 = vsyncpa [#allocation3], 1
    %526 = vsyncpa [#allocation6], 1
    %527 = vsyncpa [#allocation9], 1
    %528 = vsyncpa [#allocation4], 1

</llo_original>
